<compile_context>
chip_gen: v7x
topology: tpu7x:2x2x1
jax: 0.10.0
libtpu: 0.0.40
codegen_flags: <defaults>
</compile_context>

<pallas_src>
import functools

import jax
import jax.numpy as jnp
from jax.experimental import pallas as pl
from jax.experimental.pallas import tpu as pltpu


def _policy_kernel(x_ref, w1_ref, b1_ref, wh_ref, bh_ref, mu_ref, std_ref):
    # Hidden layer on the folded layout: [tile_f, F*obs] @ [F*obs, F*H].
    h = jnp.dot(x_ref[...], w1_ref[...], preferred_element_type=jnp.float32)
    h = jnp.maximum(h + b1_ref[...], 0.0)

    # Fused (mu | log_std) block-diagonal heads: [tile_f, F*H] @ [F*H, 2*F*A].
    z = jnp.dot(h, wh_ref[...], preferred_element_type=jnp.float32) + bh_ref[...]

    fa = mu_ref.shape[-1]                       # F * action_space lanes
    mu_ref[...] = z[:, :fa].astype(mu_ref.dtype)
    # exp only on the log_std half (EUP slot has slack; half the transcendentals
    # of the previous "exp everything then select" version).
    std_ref[...] = jnp.exp(z[:, fa:]).astype(std_ref.dtype)


def _round_up(n, m):
    return ((n + m - 1) // m) * m


def _block_diag(w, f):
    # Block-diagonal expansion with f identical blocks: kron(I_f, w).
    return jnp.kron(jnp.eye(f, dtype=w.dtype), w)


@functools.partial(jax.jit, static_argnames=("tile_rows",))
def policy_network_forward(x, params, *, tile_rows=32768):
    """x: [B, obs]  ->  (mu: [B, A], std: [B, A])."""
    w1, b1, wmu, bmu, wls, bls = params
    B, obs = x.shape
    H = w1.shape[1]
    A = wmu.shape[1]
    out_dtype = x.dtype

    # Fold factor: F*H <= 256 keeps each matmul inside one MXU weight tile on
    # v6e/v7x; for obs=16, F*obs = 128 lanes => zero lane padding on x loads.
    F = max(1, min(8, 128 // max(obs, 1)))

    # Pad B to a multiple of F only when needed (the one remaining case with an
    # extra HBM pass over x; the reshapes below are free row-major bitcasts).
    Bp = _round_up(B, F)
    x_in = x if Bp == B else jnp.pad(x, ((0, Bp - B), (0, 0)))
    Bf = Bp // F
    x_f = x_in.reshape(Bf, F * obs)

    # Block-diagonal weights / tiled biases (a few hundred KB, built per call,
    # VMEM-resident inside the kernel via constant index_maps).
    w1_bd = _block_diag(w1, F)                                    # [F*obs, F*H]
    b1_bd = jnp.tile(b1.reshape(1, H), (1, F))                    # [1, F*H]
    wh_bd = jnp.concatenate(
        [_block_diag(wmu, F), _block_diag(wls, F)], axis=1)       # [F*H, 2*F*A]
    bh_bd = jnp.concatenate(
        [jnp.tile(bmu.reshape(1, A), (1, F)),
         jnp.tile(bls.reshape(1, A), (1, F))], axis=1)            # [1, 2*F*A]

    # Balanced batch tiling over folded rows.  Non-final blocks stay sublane
    # aligned; force >=2 grid steps once there is enough work so both v7x
    # TensorCores get a share (no-op on v5e/v6e single-core chips).
    granule = 8 if jnp.dtype(x.dtype).itemsize == 4 else 16
    tile_f_max = max(granule, tile_rows // F)
    n_tiles = max(1, pl.cdiv(Bf, tile_f_max))
    if n_tiles == 1 and Bf >= 2 * granule:
        n_tiles = 2
    tile_f = pl.cdiv(Bf, n_tiles)
    if tile_f < Bf:
        tile_f = _round_up(tile_f, granule)
    grid = (pl.cdiv(Bf, tile_f),)

    FA = F * A
    wbytes = ((w1_bd.size + wh_bd.size) * w1_bd.dtype.itemsize
              + (b1_bd.size + bh_bd.size) * b1_bd.dtype.itemsize)
    cost = pl.CostEstimate(
        flops=2 * Bf * (F * obs * F * H + F * H * 2 * FA),
        transcendentals=Bp * A,
        bytes_accessed=(x_f.size * x_f.dtype.itemsize
                        + 2 * Bf * FA * jnp.dtype(out_dtype).itemsize
                        + wbytes),
    )

    mu_f, std_f = pl.pallas_call(
        _policy_kernel,
        out_shape=(jax.ShapeDtypeStruct((Bf, FA), out_dtype),
                   jax.ShapeDtypeStruct((Bf, FA), out_dtype)),
        grid_spec=pltpu.PrefetchScalarGridSpec(
            num_scalar_prefetch=0,
            grid=grid,
            in_specs=[
                pl.BlockSpec((tile_f, F * obs), lambda i: (i, 0)),  # folded x, tiled over batch
                pl.BlockSpec((F * obs, F * H), lambda i: (0, 0)),   # W1 block-diag (resident)
                pl.BlockSpec((1, F * H), lambda i: (0, 0)),         # b1
                pl.BlockSpec((F * H, 2 * FA), lambda i: (0, 0)),    # fused mu|log_std heads
                pl.BlockSpec((1, 2 * FA), lambda i: (0, 0)),        # fused head bias
            ],
            out_specs=[
                pl.BlockSpec((tile_f, FA), lambda i: (i, 0)),       # folded mu
                pl.BlockSpec((tile_f, FA), lambda i: (i, 0)),       # folded std
            ],
        ),
        compiler_params=pltpu.CompilerParams(
            dimension_semantics=("parallel",),
            # Above v5e's 16 MiB / v6e's 32 MiB scoped defaults, below v7x's
            # 64 MiB physical; default tile footprint is well under this.
            vmem_limit_bytes=48 * 1024 * 1024,
        ),
        cost_estimate=cost,
    )(x_f, w1_bd, b1_bd, wh_bd, bh_bd)

    # Free row-major bitcasts back to [B, A]; slice only if B was padded.
    mu = mu_f.reshape(Bp, A)
    std = std_f.reshape(Bp, A)
    if Bp != B:
        mu, std = mu[:B], std[:B]
    return mu, std


def init_params(key, observation_space, action_space, hidden=32):
    """PyTorch-style uniform init; weights stored as [in_features, out_features]."""
    ks = jax.random.split(key, 6)

    def _uniform(k, shape, fan_in):
        bound = float(fan_in) ** -0.5
        return jax.random.uniform(k, shape, jnp.float32, -bound, bound)

    w1 = _uniform(ks[0], (observation_space, hidden), observation_space)
    b1 = _uniform(ks[1], (hidden,), observation_space)
    wmu = _uniform(ks[2], (hidden, action_space), hidden)
    bmu = _uniform(ks[3], (action_space,), hidden)
    wls = _uniform(ks[4], (hidden, action_space), hidden)
    bls = _uniform(ks[5], (action_space,), hidden)
    return (w1, b1, wmu, bmu, wls, bls)


def _reference_forward(x, params):
    w1, b1, wmu, bmu, wls, bls = params
    h = jnp.maximum(x @ w1 + b1, 0.0)
    return h @ wmu + bmu, jnp.exp(h @ wls + bls)


if __name__ == "__main__":
    key = jax.random.PRNGKey(0)
    k_param, k_x, k_x2 = jax.random.split(key, 3)

    # Main case: batch a multiple of the fold factor -> zero wrapper copies,
    # 2-step grid (exercises the pipelined / dual-TensorCore path).
    batch, observation_space, action_space = 128, 16, 4
    params = init_params(k_param, observation_space, action_space)
    x = jax.random.normal(k_x, (batch, observation_space), jnp.float32)

    mu, std = policy_network_forward(x, params)
    jax.block_until_ready((mu, std))
    mu_ref, std_ref = _reference_forward(x, params)
    assert mu.shape == (batch, action_space) and std.shape == (batch, action_space)
    assert jnp.allclose(mu, mu_ref, atol=1e-3, rtol=1e-3)
    assert jnp.allclose(std, std_ref, atol=1e-3, rtol=1e-3)
    assert bool(jnp.all(std > 0.0))

    # Awkward case: batch not a multiple of 8, odd obs/action widths
    # (exercises the pad fallback and a non-128 folded lane width).
    batch2, obs2, act2 = 37, 10, 3
    params2 = init_params(k_param, obs2, act2)
    x2 = jax.random.normal(k_x2, (batch2, obs2), jnp.float32)
    mu2, std2 = policy_network_forward(x2, params2)
    jax.block_until_ready((mu2, std2))
    mu2_ref, std2_ref = _reference_forward(x2, params2)
    assert mu2.shape == (batch2, act2) and std2.shape == (batch2, act2)
    assert jnp.allclose(mu2, mu2_ref, atol=1e-3, rtol=1e-3)
    assert jnp.allclose(std2, std2_ref, atol=1e-3, rtol=1e-3)

    print("KERNEL_OK")
</pallas_src>

<mosaic_0001>
module attributes {stable_mosaic.version = 11 : i64} {
  func.func @_policy_kernel(%arg0: i32, %arg1: memref<8x128xf32, #tpu.memory_space<vmem>>, %arg2: memref<128x256xf32, #tpu.memory_space<vmem>>, %arg3: memref<1x256xf32, #tpu.memory_space<vmem>>, %arg4: memref<256x64xf32, #tpu.memory_space<vmem>>, %arg5: memref<1x64xf32, #tpu.memory_space<vmem>>, %arg6: memref<8x32xf32, #tpu.memory_space<vmem>>, %arg7: memref<8x32xf32, #tpu.memory_space<vmem>>) attributes {dimension_semantics = [#tpu.dimension_semantics<parallel>], iteration_bounds = array<i64: 2>, scalar_prefetch = 0 : i64, scratch_operands = 0 : i64, tpu.core_type = #tpu.core_type<tc>, window_params = [{transform_indices = @transform_0, window_bounds = array<i64: 8, 128>}, {pipeline_mode = #tpu.pipeline_mode<synchronous>, transform_indices = @transform_1, window_bounds = array<i64: 128, 256>}, {pipeline_mode = #tpu.pipeline_mode<synchronous>, transform_indices = @transform_2, window_bounds = array<i64: 1, 256>}, {pipeline_mode = #tpu.pipeline_mode<synchronous>, transform_indices = @transform_3, window_bounds = array<i64: 256, 64>}, {pipeline_mode = #tpu.pipeline_mode<synchronous>, transform_indices = @transform_4, window_bounds = array<i64: 1, 64>}, {transform_indices = @transform_5, window_bounds = array<i64: 8, 32>}, {transform_indices = @transform_6, window_bounds = array<i64: 8, 32>}]} {
    %c0 = arith.constant 0 : index
    %c0_0 = arith.constant 0 : index
    %0 = vector.load %arg1[%c0, %c0_0] : memref<8x128xf32, #tpu.memory_space<vmem>>, vector<8x128xf32>
    %c0_1 = arith.constant 0 : index
    %c0_2 = arith.constant 0 : index
    %1 = vector.load %arg2[%c0_1, %c0_2] : memref<128x256xf32, #tpu.memory_space<vmem>>, vector<128x256xf32>
    %cst = arith.constant dense<0.000000e+00> : vector<8x256xf32>
    %2 = tpu.matmul %0, %1, %cst {dimension_numbers = #tpu.dot_dimension_numbers<[1], [0], [0], [1], [0, 0, 1, 1], [], []>} : vector<8x128xf32>, vector<128x256xf32>, vector<8x256xf32> -> vector<8x256xf32>
    %c0_3 = arith.constant 0 : index
    %c0_4 = arith.constant 0 : index
    %3 = vector.load %arg3[%c0_3, %c0_4] : memref<1x256xf32, #tpu.memory_space<vmem>>, vector<1x256xf32>
    %4 = vector.broadcast %3 : vector<1x256xf32> to vector<8x256xf32>
    %5 = arith.addf %2, %4 : vector<8x256xf32>
    %cst_5 = arith.constant 0.000000e+00 : f32
    %6 = vector.broadcast %cst_5 : f32 to vector<8x256xf32>
    %7 = arith.maximumf %5, %6 : vector<8x256xf32>
    %c0_6 = arith.constant 0 : index
    %c0_7 = arith.constant 0 : index
    %8 = vector.load %arg4[%c0_6, %c0_7] : memref<256x64xf32, #tpu.memory_space<vmem>>, vector<256x64xf32>
    %cst_8 = arith.constant dense<0.000000e+00> : vector<8x64xf32>
    %9 = tpu.matmul %7, %8, %cst_8 {dimension_numbers = #tpu.dot_dimension_numbers<[1], [0], [0], [1], [0, 0, 1, 1], [], []>} : vector<8x256xf32>, vector<256x64xf32>, vector<8x64xf32> -> vector<8x64xf32>
    %c0_9 = arith.constant 0 : index
    %c0_10 = arith.constant 0 : index
    %10 = vector.load %arg5[%c0_9, %c0_10] : memref<1x64xf32, #tpu.memory_space<vmem>>, vector<1x64xf32>
    %11 = vector.broadcast %10 : vector<1x64xf32> to vector<8x64xf32>
    %12 = arith.addf %9, %11 : vector<8x64xf32>
    %13 = vector.extract_strided_slice %12 {offsets = [0, 0], sizes = [8, 32], strides = [1, 1]} : vector<8x64xf32> to vector<8x32xf32>
    %c0_11 = arith.constant 0 : index
    %c0_12 = arith.constant 0 : index
    %14 = vector.load %arg6[%c0_11, %c0_12] : memref<8x32xf32, #tpu.memory_space<vmem>>, vector<8x32xf32>
    tpu.vector_store %arg6[%c0_11, %c0_12], %13 {strides = array<i32>} : memref<8x32xf32, #tpu.memory_space<vmem>>, vector<8x32xf32>,
    %15 = vector.extract_strided_slice %12 {offsets = [0, 32], sizes = [8, 32], strides = [1, 1]} : vector<8x64xf32> to vector<8x32xf32>
    %16 = math.exp %15 : vector<8x32xf32>
    %c0_13 = arith.constant 0 : index
    %c0_14 = arith.constant 0 : index
    %17 = vector.load %arg7[%c0_13, %c0_14] : memref<8x32xf32, #tpu.memory_space<vmem>>, vector<8x32xf32>
    tpu.vector_store %arg7[%c0_13, %c0_14], %16 {strides = array<i32>} : memref<8x32xf32, #tpu.memory_space<vmem>>, vector<8x32xf32>,
    return
  }
  func.func @transform_0(%arg0: i32) -> (i32, i32) {
    %c0_i32 = arith.constant 0 : i32
    %c0_i32_0 = arith.constant 0 : i32
    return %arg0, %c0_i32 : i32, i32
  }
  func.func @transform_1(%arg0: i32) -> (i32, i32) {
    %c0_i32 = arith.constant 0 : i32
    %c0_i32_0 = arith.constant 0 : i32
    %c0_i32_1 = arith.constant 0 : i32
    return %c0_i32, %c0_i32_0 : i32, i32
  }
  func.func @transform_2(%arg0: i32) -> (i32, i32) {
    %c0_i32 = arith.constant 0 : i32
    %c0_i32_0 = arith.constant 0 : i32
    %c0_i32_1 = arith.constant 0 : i32
    return %c0_i32, %c0_i32_0 : i32, i32
  }
  func.func @transform_3(%arg0: i32) -> (i32, i32) {
    %c0_i32 = arith.constant 0 : i32
    %c0_i32_0 = arith.constant 0 : i32
    %c0_i32_1 = arith.constant 0 : i32
    return %c0_i32, %c0_i32_0 : i32, i32
  }
  func.func @transform_4(%arg0: i32) -> (i32, i32) {
    %c0_i32 = arith.constant 0 : i32
    %c0_i32_0 = arith.constant 0 : i32
    %c0_i32_1 = arith.constant 0 : i32
    return %c0_i32, %c0_i32_0 : i32, i32
  }
  func.func @transform_5(%arg0: i32) -> (i32, i32) {
    %c0_i32 = arith.constant 0 : i32
    %c0_i32_0 = arith.constant 0 : i32
    return %arg0, %c0_i32 : i32, i32
  }
  func.func @transform_6(%arg0: i32) -> (i32, i32) {
    %c0_i32 = arith.constant 0 : i32
    %c0_i32_0 = arith.constant 0 : i32
    return %arg0, %c0_i32 : i32, i32
  }
}

</mosaic_0001>

<llo_original>
// kernel: policy_network_forward.1
$region0: #{policy_network_forward.1}
  #allocation0 [shape = 'u32[]', space=smem, size = 0x4, offset = 0x4, fixed_abs, tag = 'smem constant byte address 0x4 - core index']
  #allocation1 [shape = 'u32[144,128]{1,0:T(1,128)}', space=vmem, size = 0x12000, scoped, tag = 'internal scratch']
  %s0 = inlined_call_operand.vmem [shape: f32[16,128], index: 0, kind: input, shape index: {}]
  %s1 = inlined_call_operand.vmem [shape: f32[128,256], index: 1, kind: input, shape index: {}]
  %s2 = inlined_call_operand.vmem [shape: f32[1,256], index: 2, kind: input, shape index: {}]
  %s3 = inlined_call_operand.vmem [shape: f32[256,64], index: 3, kind: input, shape index: {}]
  %s4 = inlined_call_operand.vmem [shape: f32[1,64], index: 4, kind: input, shape index: {}]
  %s5 = inlined_call_operand.vmem [shape: f32[16,32], index: 5, kind: output, shape index: {0}]
  %s6 = inlined_call_operand.vmem [shape: f32[16,32], index: 6, kind: output, shape index: {1}]
  %7 = xla_tuple %s5, %s6
  %s8 = sld [smem:[#allocation0]]
  $region61: #{policy_network_forward.1} parent=0
    _
  %s10 = ssub.s32 1, %s8
  %s11 = scalar_select 0, %s10, %s8
  loop: start=0, step=1, limit=4
  $region2: #{policy_network_forward.1} parent=0 // loop_pre_header
    _
  $region3: #{policy_network_forward.1} parent=0 // loop_header
    %s13 = sphi 0, %s17
    %p14 = scmp.ge.s32.totalorder %s13, 4
    %s23 = sphi 0, %s25
    %s26 = sphi 0, %s23
    %s27 = sphi 0, %s26
    %s43 = sphi 0, %s27
    %s47 = sphi 0, %s47
    %s49 = sphi 0, %s47
    %s50 = sphi 0, %s49
    %s64 = sphi 0, %s50
    %s68 = sphi 0, %s68
    %s70 = sphi 0, %s68
    %s71 = sphi 0, %s70
    %s85 = sphi 0, %s71
    %s89 = sphi 0, %s89
    %s91 = sphi 0, %s89
    %s92 = sphi 0, %s91
    %s106 = sphi 0, %s92
    %s110 = sphi 0, %s110
    %s112 = sphi 0, %s110
    %s113 = sphi 0, %s112
    %s127 = sphi 0, %s113
    %s133 = sphi 0, %s135
    %s136 = sphi 0, %s133
    %s137 = sphi 0, %s136
    %s153 = sphi 0, %s137
    %s159 = sphi 0, %s161
    %s162 = sphi 0, %s159
    %s163 = sphi 0, %s162
    %s179 = sphi 0, %s163
  $region4: #{policy_network_forward.1} parent=0 // loop_header_branch
    %16 = sbr.rel (%p14) target = $region8
  $region5: #{policy_network_forward.1} parent=0 // loop_body
    %s18 = ssub.s32 %s13, 1
    %s19 = ssub.s32 %s13, 2
    %s20 = sadd.s32 %s13, 1
    %s21 = ssub.s32 %s13, %s20
    %p22 = scmp.eq.s32.totalorder %s21, 0
    %s24 = sadd.s32 %s23, 1
    %s25 = scalar_select %p22, %s23, %s24
    %p28 = pneg %p22
    %p29 = scmp.eq.s32.totalorder %s13, 1
    %p30 = por %p28, %p29
    %p31 = scmp.ne.s32.totalorder %s23, %s26
    %p32 = scmp.eq.s32.totalorder %s13, 0
    %p33 = por %p31, %p32
    %p34 = scmp.ne.s32.totalorder %s23, %s26
    %p35 = scmp.eq.s32.totalorder %s18, 1
    %p36 = por %p34, %p35
    %p37 = scmp.ne.s32.totalorder %s26, %s27
    %p38 = scmp.eq.s32.totalorder %s18, 0
    %p39 = por %p37, %p38
    %p40 = scmp.ne.s32.totalorder %s26, %s27
    %p41 = scmp.eq.s32.totalorder %s19, 1
    %p42 = por %p40, %p41
    %p44 = scmp.ne.s32.totalorder %s27, %s43
    %p45 = scmp.eq.s32.totalorder %s19, 0
    %p46 = por %p44, %p45
    %s48 = sadd.s32 %s47, 1
    %p51 = scmp.eq.s32.totalorder %s13, 1
    %p52 = scmp.ne.s32.totalorder %s47, %s49
    %p53 = scmp.eq.s32.totalorder %s13, 0
    %p54 = por %p52, %p53
    %p55 = scmp.ne.s32.totalorder %s47, %s49
    %p56 = scmp.eq.s32.totalorder %s18, 1
    %p57 = por %p55, %p56
    %p58 = scmp.ne.s32.totalorder %s49, %s50
    %p59 = scmp.eq.s32.totalorder %s18, 0
    %p60 = por %p58, %p59
    %p61 = scmp.ne.s32.totalorder %s49, %s50
    %p62 = scmp.eq.s32.totalorder %s19, 1
    %p63 = por %p61, %p62
    %p65 = scmp.ne.s32.totalorder %s50, %s64
    %p66 = scmp.eq.s32.totalorder %s19, 0
    %p67 = por %p65, %p66
    %s69 = sadd.s32 %s68, 1
    %p72 = scmp.eq.s32.totalorder %s13, 1
    %p73 = scmp.ne.s32.totalorder %s68, %s70
    %p74 = scmp.eq.s32.totalorder %s13, 0
    %p75 = por %p73, %p74
    %p76 = scmp.ne.s32.totalorder %s68, %s70
    %p77 = scmp.eq.s32.totalorder %s18, 1
    %p78 = por %p76, %p77
    %p79 = scmp.ne.s32.totalorder %s70, %s71
    %p80 = scmp.eq.s32.totalorder %s18, 0
    %p81 = por %p79, %p80
    %p82 = scmp.ne.s32.totalorder %s70, %s71
    %p83 = scmp.eq.s32.totalorder %s19, 1
    %p84 = por %p82, %p83
    %p86 = scmp.ne.s32.totalorder %s71, %s85
    %p87 = scmp.eq.s32.totalorder %s19, 0
    %p88 = por %p86, %p87
    %s90 = sadd.s32 %s89, 1
    %p93 = scmp.eq.s32.totalorder %s13, 1
    %p94 = scmp.ne.s32.totalorder %s89, %s91
    %p95 = scmp.eq.s32.totalorder %s13, 0
    %p96 = por %p94, %p95
    %p97 = scmp.ne.s32.totalorder %s89, %s91
    %p98 = scmp.eq.s32.totalorder %s18, 1
    %p99 = por %p97, %p98
    %p100 = scmp.ne.s32.totalorder %s91, %s92
    %p101 = scmp.eq.s32.totalorder %s18, 0
    %p102 = por %p100, %p101
    %p103 = scmp.ne.s32.totalorder %s91, %s92
    %p104 = scmp.eq.s32.totalorder %s19, 1
    %p105 = por %p103, %p104
    %p107 = scmp.ne.s32.totalorder %s92, %s106
    %p108 = scmp.eq.s32.totalorder %s19, 0
    %p109 = por %p107, %p108
    %s111 = sadd.s32 %s110, 1
    %p114 = scmp.eq.s32.totalorder %s13, 1
    %p115 = scmp.ne.s32.totalorder %s110, %s112
    %p116 = scmp.eq.s32.totalorder %s13, 0
    %p117 = por %p115, %p116
    %p118 = scmp.ne.s32.totalorder %s110, %s112
    %p119 = scmp.eq.s32.totalorder %s18, 1
    %p120 = por %p118, %p119
    %p121 = scmp.ne.s32.totalorder %s112, %s113
    %p122 = scmp.eq.s32.totalorder %s18, 0
    %p123 = por %p121, %p122
    %p124 = scmp.ne.s32.totalorder %s112, %s113
    %p125 = scmp.eq.s32.totalorder %s19, 1
    %p126 = por %p124, %p125
    %p128 = scmp.ne.s32.totalorder %s113, %s127
    %p129 = scmp.eq.s32.totalorder %s19, 0
    %p130 = por %p128, %p129
    %s131 = ssub.s32 %s13, %s20
    %p132 = scmp.eq.s32.totalorder %s131, 0
    %s134 = sadd.s32 %s133, 1
    %s135 = scalar_select %p132, %s133, %s134
    %p138 = pneg %p132
    %p139 = scmp.eq.s32.totalorder %s13, 1
    %p140 = por %p138, %p139
    %p141 = scmp.ne.s32.totalorder %s133, %s136
    %p142 = scmp.eq.s32.totalorder %s13, 0
    %p143 = por %p141, %p142
    %p144 = scmp.ne.s32.totalorder %s133, %s136
    %p145 = scmp.eq.s32.totalorder %s18, 1
    %p146 = por %p144, %p145
    %p147 = scmp.ne.s32.totalorder %s136, %s137
    %p148 = scmp.eq.s32.totalorder %s18, 0
    %p149 = por %p147, %p148
    %p150 = scmp.ne.s32.totalorder %s136, %s137
    %p151 = scmp.eq.s32.totalorder %s19, 1
    %p152 = por %p150, %p151
    %p154 = scmp.ne.s32.totalorder %s137, %s153
    %p155 = scmp.eq.s32.totalorder %s19, 0
    %p156 = por %p154, %p155
    %s157 = ssub.s32 %s13, %s20
    %p158 = scmp.eq.s32.totalorder %s157, 0
    %s160 = sadd.s32 %s159, 1
    %s161 = scalar_select %p158, %s159, %s160
    %p164 = pneg %p158
    %p165 = scmp.eq.s32.totalorder %s13, 1
    %p166 = por %p164, %p165
    %p167 = scmp.ne.s32.totalorder %s159, %s162
    %p168 = scmp.eq.s32.totalorder %s13, 0
    %p169 = por %p167, %p168
    %p170 = scmp.ne.s32.totalorder %s159, %s162
    %p171 = scmp.eq.s32.totalorder %s18, 1
    %p172 = por %p170, %p171
    %p173 = scmp.ne.s32.totalorder %s162, %s163
    %p174 = scmp.eq.s32.totalorder %s18, 0
    %p175 = por %p173, %p174
    %p176 = scmp.ne.s32.totalorder %s162, %s163
    %p177 = scmp.eq.s32.totalorder %s19, 1
    %p178 = por %p176, %p177
    %p180 = scmp.ne.s32.totalorder %s163, %s179
    %p181 = scmp.eq.s32.totalorder %s19, 0
    %p182 = por %p180, %p181
    %p183 = scmp.le.s32.totalorder 1, %s13
    %p184 = scmp.lt.s32.totalorder %s13, 3
    %p185 = pnand %p183, %p184
    %p186 = pneg %p185
    // Predicated region
    $region9: #{policy_network_forward.1} parent=5 // pred_check
      _
    $region10: #{policy_network_forward.1} parent=5 // pred_check_branch
      %188 = sbr.rel (%p185) target = $region12
    $region11: #{policy_network_forward.1} parent=5 // pred_region
      %s189 = ssub.s32 %s13, 1
      // Predicated region
      $region13: #{policy_network_forward.1} parent=11 // pred_check
        %p190 = pneg %p60
      $region14: #{policy_network_forward.1} parent=11 // pred_check_branch
        %192 = sbr.rel (%p190) target = $region16
      $region15: #{policy_network_forward.1} parent=11 // pred_region
        _
      $region16: #{policy_network_forward.1} parent=11 // pred_fallthru
        _
      // Predicated region
      $region17: #{policy_network_forward.1} parent=11 // pred_check
        %p193 = pneg %p81
      $region18: #{policy_network_forward.1} parent=11 // pred_check_branch
        %195 = sbr.rel (%p193) target = $region20
      $region19: #{policy_network_forward.1} parent=11 // pred_region
        _
      $region20: #{policy_network_forward.1} parent=11 // pred_fallthru
        _
      // Predicated region
      $region21: #{policy_network_forward.1} parent=11 // pred_check
        %p196 = pneg %p102
      $region22: #{policy_network_forward.1} parent=11 // pred_check_branch
        %198 = sbr.rel (%p196) target = $region24
      $region23: #{policy_network_forward.1} parent=11 // pred_region
        _
      $region24: #{policy_network_forward.1} parent=11 // pred_fallthru
        _
      // Predicated region
      $region25: #{policy_network_forward.1} parent=11 // pred_check
        %p199 = pneg %p123
      $region26: #{policy_network_forward.1} parent=11 // pred_check_branch
        %201 = sbr.rel (%p199) target = $region28
      $region27: #{policy_network_forward.1} parent=11 // pred_region
        _
      $region28: #{policy_network_forward.1} parent=11 // pred_fallthru
        _
    $region12: #{policy_network_forward.1} parent=5 // pred_fallthru
      _
    %p202 = scmp.lt.s32.totalorder %s13, 2
    // Predicated region
    $region29: #{policy_network_forward.1} parent=5 // pred_check
      %p203 = pneg %p202
    $region30: #{policy_network_forward.1} parent=5 // pred_check_branch
      %205 = sbr.rel (%p203) target = $region32
    $region31: #{policy_network_forward.1} parent=5 // pred_region
      // Predicated region
      $region33: #{policy_network_forward.1} parent=31 // pred_check
        %p206 = pneg %p33
      $region34: #{policy_network_forward.1} parent=31 // pred_check_branch
        %208 = sbr.rel (%p206) target = $region36
      $region35: #{policy_network_forward.1} parent=31 // pred_region
        %p209 = scmp.lt.s32.totalorder %s13, 1
        %s210 = scalar_select %p209, %s13, 1
        %s211 = smul.addr %s210, 8
        %s212 = scalar_lea.vmem %s0, %s211
      $region36: #{policy_network_forward.1} parent=31 // pred_fallthru
        _
    $region32: #{policy_network_forward.1} parent=5 // pred_fallthru
      _
    %p213 = scmp.le.s32.totalorder 1, %s13
    %p214 = scmp.lt.s32.totalorder %s13, 3
    %p215 = pnand %p213, %p214
    %p216 = pneg %p215
    // Predicated region
    $region37: #{policy_network_forward.1} parent=5 // pred_check
      _
    $region38: #{policy_network_forward.1} parent=5 // pred_check_branch
      %218 = sbr.rel (%p215) target = $region40
    $region39: #{policy_network_forward.1} parent=5 // pred_region
      %s219 = ssub.s32 %s13, 1
      %p220 = scmp.lt.s32.totalorder %s18, 1
      %s221 = scalar_select %p220, %s18, 1
      %s222 = smul.addr %s221, 8
      %s223 = scalar_lea.vmem %s0, %s222
      %p224 = pneg %p39
      %p225 = pneg %p36
      %p226 = pneg %p60
      %p227 = pneg %p57
      %p228 = pneg %p81
      %p229 = pneg %p78
      %p230 = pneg %p102
      %p231 = pneg %p99
      %p232 = pneg %p123
      %p233 = pneg %p120
      %p234 = pneg %p149
      %p235 = pneg %p146
      %p236 = scmp.lt.s32.totalorder %s18, 1
      %s237 = scalar_select %p236, %s18, 1
      %s238 = smul.addr %s237, 8
      %s239 = scalar_lea.vmem %s5, %s238
      %p240 = pneg %p175
      %p241 = pneg %p172
      %p242 = scmp.lt.s32.totalorder %s18, 1
      %s243 = scalar_select %p242, %s18, 1
      %s244 = smul.addr %s243, 8
      %s245 = scalar_lea.vmem %s6, %s244
      %p246 = scmp.lt.s32.totalorder %s18, 1
      %s247 = scalar_select %p246, %s18, 1
      %s248 = smul.addr %s247, 8
      %s249 = scalar_lea.vmem %s0, %s248
      %p250 = scmp.lt.s32.totalorder %s18, 1
      %s251 = scalar_select %p250, %s18, 1
      %s252 = smul.addr %s251, 8
      %s253 = scalar_lea.vmem %s5, %s252
      %p254 = scmp.lt.s32.totalorder %s18, 1
      %s255 = scalar_select %p254, %s18, 1
      %s256 = smul.addr %s255, 8
      %s257 = scalar_lea.vmem %s6, %s256
      %v258 = vld [vmem:[%s249] sm:$0xff]
      %v259 = vld [vmem:[%s1] sm:$0xff]
      %v260 = vld [vmem:[%s1 + $0x8] sm:$0xff]
      %v261 = vld [vmem:[%s1 + $0x10] sm:$0xff]
      %v262 = vld [vmem:[%s1 + $0x18] sm:$0xff]
      %v263 = vld [vmem:[%s1 + $0x20] sm:$0xff]
      %v264 = vld [vmem:[%s1 + $0x28] sm:$0xff]
      %v265 = vld [vmem:[%s1 + $0x30] sm:$0xff]
      %v266 = vld [vmem:[%s1 + $0x38] sm:$0xff]
      %v267 = vld [vmem:[%s1 + $0x40] sm:$0xff]
      %v268 = vld [vmem:[%s1 + $0x48] sm:$0xff]
      %v269 = vld [vmem:[%s1 + $0x50] sm:$0xff]
      %v270 = vld [vmem:[%s1 + $0x58] sm:$0xff]
      %v271 = vld [vmem:[%s1 + $0x60] sm:$0xff]
      %v272 = vld [vmem:[%s1 + $0x68] sm:$0xff]
      %v273 = vld [vmem:[%s1 + $0x70] sm:$0xff]
      %v274 = vld [vmem:[%s1 + $0x78] sm:$0xff]
      %v275 = vld [vmem:[%s1 + $0x80] sm:$0xff]
      %v276 = vld [vmem:[%s1 + $0x88] sm:$0xff]
      %v277 = vld [vmem:[%s1 + $0x90] sm:$0xff]
      %v278 = vld [vmem:[%s1 + $0x98] sm:$0xff]
      %v279 = vld [vmem:[%s1 + $0xa0] sm:$0xff]
      %v280 = vld [vmem:[%s1 + $0xa8] sm:$0xff]
      %v281 = vld [vmem:[%s1 + $0xb0] sm:$0xff]
      %v282 = vld [vmem:[%s1 + $0xb8] sm:$0xff]
      %v283 = vld [vmem:[%s1 + $0xc0] sm:$0xff]
      %v284 = vld [vmem:[%s1 + $0xc8] sm:$0xff]
      %v285 = vld [vmem:[%s1 + $0xd0] sm:$0xff]
      %v286 = vld [vmem:[%s1 + $0xd8] sm:$0xff]
      %v287 = vld [vmem:[%s1 + $0xe0] sm:$0xff]
      %v288 = vld [vmem:[%s1 + $0xe8] sm:$0xff]
      %v289 = vld [vmem:[%s1 + $0xf0] sm:$0xff]
      %v290 = vld [vmem:[%s1 + $0xf8] sm:$0xff]
      %v291 = vld [vmem:[%s2] sm:$0x3]
      %v293 = vlaneseq
      %v294 = vshrl.u32 %v293, 7
      %v295 = vsub.s32 0, %v294
      %v296 = vrot.slane %v291, %v295
      %v297 = vlaneseq
      %v298 = vshrl.u32 %v297, 7
      %v299 = vsub.s32 1, %v298
      %v300 = vrot.slane %v291, %v299
      %303 = vmatprep.subr.mxu0 %v260
      %304 = vmatpush1.msra.mxu0 %v259
      %305 = vmatprep.subr.mxu0 %v262
      %306 = vmatpush1.msra.mxu0 %v261
      %307 = vmatprep.subr.mxu0 %v264
      %308 = vmatpush1.msra.mxu0 %v263
      %309 = vmatprep.subr.mxu0 %v266
      %310 = vmatpush1.msra.mxu0 %v265
      %311 = vmatprep.subr.mxu0 %v268
      %312 = vmatpush1.msra.mxu0 %v267
      %313 = vmatprep.subr.mxu0 %v270
      %314 = vmatpush1.msra.mxu0 %v269
      %315 = vmatprep.subr.mxu0 %v272
      %316 = vmatpush1.msra.mxu0 %v271
      %317 = vmatprep.subr.mxu0 %v274
      %318 = vmatpush1.msra.mxu0 %v273
      %319 = vmatprep.subr.mxu0 %v276
      %320 = vmatpush1.msra.mxu0 %v275
      %321 = vmatprep.subr.mxu0 %v278
      %322 = vmatpush1.msra.mxu0 %v277
      %323 = vmatprep.subr.mxu0 %v280
      %324 = vmatpush1.msra.mxu0 %v279
      %325 = vmatprep.subr.mxu0 %v282
      %326 = vmatpush1.msra.mxu0 %v281
      %327 = vmatprep.subr.mxu0 %v284
      %328 = vmatpush1.msra.mxu0 %v283
      %329 = vmatprep.subr.mxu0 %v286
      %330 = vmatpush1.msra.mxu0 %v285
      %331 = vmatprep.subr.mxu0 %v288
      %332 = vmatpush1.msra.mxu0 %v287
      %333 = vmatprep.subr.mxu0 %v290
      %334 = vmatpush1.msra.mxu0 %v289
      %335 = vmatprep.subr.mxu0 0.0
      %336 = vmatpush1.msra.mxu0 0.0
      %337 = vmatprep.subr.mxu0 0.0
      %338 = vmatpush1.msra.mxu0 0.0
      %339 = vmatprep.subr.mxu0 0.0
      %340 = vmatpush1.msra.mxu0 0.0
      %341 = vmatprep.subr.mxu0 0.0
      %342 = vmatpush1.msra.mxu0 0.0
      %343 = vmatprep.subr.mxu0 0.0
      %344 = vmatpush1.msra.mxu0 0.0
      %345 = vmatprep.subr.mxu0 0.0
      %346 = vmatpush1.msra.mxu0 0.0
      %347 = vmatprep.subr.mxu0 0.0
      %348 = vmatpush1.msra.mxu0 0.0
      %349 = vmatprep.subr.mxu0 0.0
      %350 = vmatpush1.msra.mxu0 0.0
      %351 = vmatprep.subr.mxu0 0.0
      %352 = vmatpush1.msra.mxu0 0.0
      %353 = vmatprep.subr.mxu0 0.0
      %354 = vmatpush1.msra.mxu0 0.0
      %355 = vmatprep.subr.mxu0 0.0
      %356 = vmatpush1.msra.mxu0 0.0
      %357 = vmatprep.subr.mxu0 0.0
      %358 = vmatpush1.msra.mxu0 0.0
      %359 = vmatprep.subr.mxu0 0.0
      %360 = vmatpush1.msra.mxu0 0.0
      %361 = vmatprep.subr.mxu0 0.0
      %362 = vmatpush1.msra.mxu0 0.0
      %363 = vmatprep.subr.mxu0 0.0
      %364 = vmatpush1.msra.mxu0 0.0
      %365 = vmatprep.subr.mxu0 0.0
      %366 = vmatpush1.msra.mxu0 0.0
      %367 = vmatprep.mubr.f32.mxu0 0.0
      %368 = vmatmul.mubr.f32.gmra.mrb[0].mxu0 %v258
      %v369 = vpop.f32.mrb[0].mxu0
      %v370 = vadd.f32 %v296, %v369
      %v371 = vpop.f32.mrb[0].mxu0
      %v372 = vadd.f32 %v300, %v371
      %373 = vdwg.mxu0
      %v374 = vmax.f32 %v370, 0.0
      %v375 = vmax.f32 %v372, 0.0
      %v376 = vld [vmem:[%s3] sm:$0xff]
      %v377 = vld [vmem:[%s3 + $0x8] sm:$0xff]
      %v378 = vld [vmem:[%s3 + $0x10] sm:$0xff]
      %v379 = vld [vmem:[%s3 + $0x18] sm:$0xff]
      %v380 = vld [vmem:[%s3 + $0x20] sm:$0xff]
      %v381 = vld [vmem:[%s3 + $0x28] sm:$0xff]
      %v382 = vld [vmem:[%s3 + $0x30] sm:$0xff]
      %v383 = vld [vmem:[%s3 + $0x38] sm:$0xff]
      %v384 = vld [vmem:[%s3 + $0x40] sm:$0xff]
      %v385 = vld [vmem:[%s3 + $0x48] sm:$0xff]
      %v386 = vld [vmem:[%s3 + $0x50] sm:$0xff]
      %v387 = vld [vmem:[%s3 + $0x58] sm:$0xff]
      %v388 = vld [vmem:[%s3 + $0x60] sm:$0xff]
      %v389 = vld [vmem:[%s3 + $0x68] sm:$0xff]
      %v390 = vld [vmem:[%s3 + $0x70] sm:$0xff]
      %v391 = vld [vmem:[%s3 + $0x78] sm:$0xff]
      %v392 = vld [vmem:[%s3 + $0x80] sm:$0xff]
      %v393 = vld [vmem:[%s3 + $0x88] sm:$0xff]
      %v394 = vld [vmem:[%s3 + $0x90] sm:$0xff]
      %v395 = vld [vmem:[%s3 + $0x98] sm:$0xff]
      %v396 = vld [vmem:[%s3 + $0xa0] sm:$0xff]
      %v397 = vld [vmem:[%s3 + $0xa8] sm:$0xff]
      %v398 = vld [vmem:[%s3 + $0xb0] sm:$0xff]
      %v399 = vld [vmem:[%s3 + $0xb8] sm:$0xff]
      %v400 = vld [vmem:[%s3 + $0xc0] sm:$0xff]
      %v401 = vld [vmem:[%s3 + $0xc8] sm:$0xff]
      %v402 = vld [vmem:[%s3 + $0xd0] sm:$0xff]
      %v403 = vld [vmem:[%s3 + $0xd8] sm:$0xff]
      %v404 = vld [vmem:[%s3 + $0xe0] sm:$0xff]
      %v405 = vld [vmem:[%s3 + $0xe8] sm:$0xff]
      %v406 = vld [vmem:[%s3 + $0xf0] sm:$0xff]
      %v407 = vld [vmem:[%s3 + $0xf8] sm:$0xff]
      %v408 = vld [vmem:[%s4] sm:$0x1]
      %v410 = vlaneseq
      %v411 = vshrl.u32 %v410, 7
      %v412 = vsub.s32 0, %v411
      %v413 = vrot.slane %v408, %v412
      %415 = vmatprep.subr.mxu0 0.0
      %416 = vmatpush1.msra.mxu0 %v376
      %417 = vmatprep.subr.mxu0 0.0
      %418 = vmatpush1.msra.mxu0 %v377
      %419 = vmatprep.subr.mxu0 0.0
      %420 = vmatpush1.msra.mxu0 %v378
      %421 = vmatprep.subr.mxu0 0.0
      %422 = vmatpush1.msra.mxu0 %v379
      %423 = vmatprep.subr.mxu0 0.0
      %424 = vmatpush1.msra.mxu0 %v380
      %425 = vmatprep.subr.mxu0 0.0
      %426 = vmatpush1.msra.mxu0 %v381
      %427 = vmatprep.subr.mxu0 0.0
      %428 = vmatpush1.msra.mxu0 %v382
      %429 = vmatprep.subr.mxu0 0.0
      %430 = vmatpush1.msra.mxu0 %v383
      %431 = vmatprep.subr.mxu0 0.0
      %432 = vmatpush1.msra.mxu0 %v384
      %433 = vmatprep.subr.mxu0 0.0
      %434 = vmatpush1.msra.mxu0 %v385
      %435 = vmatprep.subr.mxu0 0.0
      %436 = vmatpush1.msra.mxu0 %v386
      %437 = vmatprep.subr.mxu0 0.0
      %438 = vmatpush1.msra.mxu0 %v387
      %439 = vmatprep.subr.mxu0 0.0
      %440 = vmatpush1.msra.mxu0 %v388
      %441 = vmatprep.subr.mxu0 0.0
      %442 = vmatpush1.msra.mxu0 %v389
      %443 = vmatprep.subr.mxu0 0.0
      %444 = vmatpush1.msra.mxu0 %v390
      %445 = vmatprep.subr.mxu0 0.0
      %446 = vmatpush1.msra.mxu0 %v391
      %447 = vmatprep.subr.mxu0 0.0
      %448 = vmatpush1.msra.mxu0 %v392
      %449 = vmatprep.subr.mxu0 0.0
      %450 = vmatpush1.msra.mxu0 %v393
      %451 = vmatprep.subr.mxu0 0.0
      %452 = vmatpush1.msra.mxu0 %v394
      %453 = vmatprep.subr.mxu0 0.0
      %454 = vmatpush1.msra.mxu0 %v395
      %455 = vmatprep.subr.mxu0 0.0
      %456 = vmatpush1.msra.mxu0 %v396
      %457 = vmatprep.subr.mxu0 0.0
      %458 = vmatpush1.msra.mxu0 %v397
      %459 = vmatprep.subr.mxu0 0.0
      %460 = vmatpush1.msra.mxu0 %v398
      %461 = vmatprep.subr.mxu0 0.0
      %462 = vmatpush1.msra.mxu0 %v399
      %463 = vmatprep.subr.mxu0 0.0
      %464 = vmatpush1.msra.mxu0 %v400
      %465 = vmatprep.subr.mxu0 0.0
      %466 = vmatpush1.msra.mxu0 %v401
      %467 = vmatprep.subr.mxu0 0.0
      %468 = vmatpush1.msra.mxu0 %v402
      %469 = vmatprep.subr.mxu0 0.0
      %470 = vmatpush1.msra.mxu0 %v403
      %471 = vmatprep.subr.mxu0 0.0
      %472 = vmatpush1.msra.mxu0 %v404
      %473 = vmatprep.subr.mxu0 0.0
      %474 = vmatpush1.msra.mxu0 %v405
      %475 = vmatprep.subr.mxu0 0.0
      %476 = vmatpush1.msra.mxu0 %v406
      %477 = vmatprep.subr.mxu0 0.0
      %478 = vmatpush1.msra.mxu0 %v407
      %479 = vmatprep.mubr.f32.mxu0 %v375
      %480 = vmatmul.mubr.f32.gmra.mrb[0].mxu0 %v374
      %v481 = vpop.f32.mrb[0].mxu0
      %v482 = vadd.f32 %v413, %v481
      %v483 = vpop.f32.mrb[0].mxu0
      %484 = vdwg.mxu0
      %vm485 = vcmask 261120
      %486 = vst.msk [vmem:[%s253] sm:$0xff] %vm485, %v482
      %v487 = vmul.f32 %v482, 1.442695
      %v488 = vpow.pop %v487
      %490 = vrot.lane.b32.xlu0 %v488, 96
      %v491 = vpop.permute.xlu0 %490
      %493 = vst.msk [vmem:[%s257] sm:$0xff] %vm485, %v491
      %p494 = scmp.lt.s32.totalorder %s18, 1
      %s495 = scalar_select %p494, %s18, 1
      %s496 = smul.addr %s495, 8
      %s497 = scalar_lea.vmem %s5, %s496
      %p498 = scmp.lt.s32.totalorder %s18, 1
      %s499 = scalar_select %p498, %s18, 1
      %s500 = smul.addr %s499, 8
      %s501 = scalar_lea.vmem %s6, %s500
      // Predicated region
      $region41: #{policy_network_forward.1} parent=39 // pred_check
        %p502 = pneg %p146
      $region42: #{policy_network_forward.1} parent=39 // pred_check_branch
        %504 = sbr.rel (%p502) target = $region44
      $region43: #{policy_network_forward.1} parent=39 // pred_region
        _
      $region44: #{policy_network_forward.1} parent=39 // pred_fallthru
        _
      // Predicated region
      $region45: #{policy_network_forward.1} parent=39 // pred_check
        %p505 = pneg %p172
      $region46: #{policy_network_forward.1} parent=39 // pred_check_branch
        %507 = sbr.rel (%p505) target = $region48
      $region47: #{policy_network_forward.1} parent=39 // pred_region
        _
      $region48: #{policy_network_forward.1} parent=39 // pred_fallthru
        _
    $region40: #{policy_network_forward.1} parent=5 // pred_fallthru
      _
    %p508 = scmp.le.s32.totalorder 2, %s13
    // Predicated region
    $region49: #{policy_network_forward.1} parent=5 // pred_check
      %p509 = pneg %p508
    $region50: #{policy_network_forward.1} parent=5 // pred_check_branch
      %511 = sbr.rel (%p509) target = $region52
    $region51: #{policy_network_forward.1} parent=5 // pred_region
      %s512 = ssub.s32 %s13, 2
      // Predicated region
      $region53: #{policy_network_forward.1} parent=51 // pred_check
        %p513 = pneg %p152
      $region54: #{policy_network_forward.1} parent=51 // pred_check_branch
        %515 = sbr.rel (%p513) target = $region56
      $region55: #{policy_network_forward.1} parent=51 // pred_region
        %p516 = scmp.lt.s32.totalorder %s19, 1
        %s517 = scalar_select %p516, %s19, 1
        %s518 = smul.addr %s517, 8
        %s519 = scalar_lea.vmem %s5, %s518
      $region56: #{policy_network_forward.1} parent=51 // pred_fallthru
        _
      // Predicated region
      $region57: #{policy_network_forward.1} parent=51 // pred_check
        %p520 = pneg %p178
      $region58: #{policy_network_forward.1} parent=51 // pred_check_branch
        %522 = sbr.rel (%p520) target = $region60
      $region59: #{policy_network_forward.1} parent=51 // pred_region
        %p523 = scmp.lt.s32.totalorder %s19, 1
        %s524 = scalar_select %p523, %s19, 1
        %s525 = smul.addr %s524, 8
        %s526 = scalar_lea.vmem %s6, %s525
      $region60: #{policy_network_forward.1} parent=51 // pred_fallthru
        _
    $region52: #{policy_network_forward.1} parent=5 // pred_fallthru
      _
  $region6: #{policy_network_forward.1} parent=0 // loop_footer
    %s17 = sadd.s32 1, %s13
  $region7: #{policy_network_forward.1} parent=0 // loop_footer_branch
    %12 = sbr.rel target = $region3
  $region8: #{policy_network_forward.1} parent=0 // loop_exit
    _

</llo_original>
